<compile_context>
chip_gen: v6e
topology: v6e:2x2x1
jax: 0.10.0
libtpu: 0.0.40
codegen_flags: <defaults>
</compile_context>

<pallas_src>
import jax
import jax.numpy as jnp
from jax.experimental import pallas as pl
from jax.experimental.pallas import tpu as pltpu

# ----------------------------- model dims -----------------------------------
N = 2                    # batch
C_IN = 3                 # video / face channels
T = 8                    # video time steps
H = W = 16               # spatial
HW = H * W               # 256
DV = C_IN * HW           # flattened video frame dim  (768)
DF = C_IN * HW           # flattened face frame dim   (768)
C_ENC = 32               # VideoExtractor feature dim
F_FACE = 32              # FaceRecognizer embedding dim
N_MELS = 16              # decoder mel output dim
T_MEL = 8                # melspec length (teacher forcing input, unused here)
M_OUT = N_MELS + 1       # fused mel + gate output lanes
NT = N * T               # batch folded into matmul M dimension

ENC_COLS = C_ENC + F_FACE        # fused encoder|face output lanes (64)
HEAD_FACE_OFF = 128              # face head block starts at a lane-tile boundary
HEAD_COLS = HEAD_FACE_OFF + M_OUT
BIAS_OUT_OFF = 128               # decoder-head bias starts at a lane-tile boundary
BIAS_COLS = BIAS_OUT_OFF + M_OUT


# ------------------------------ kernel ---------------------------------------
def lip2speech_kernel(vid_ref, face_ref, w_encface_ref, w_head_ref, bias_ref,
                      out_ref):
    # Activations arrive in f32 (no wrapper cast); weights are pre-cast bf16.
    v = vid_ref[...]                          # (N, C, T, HW) f32
    f = face_ref[...][:, 0, :]                # (N, DF) f32 -- first face frame

    # In-VMEM (c, t) reorder: three lane-aligned concatenations (offsets
    # 0/256/512 are 128-multiples) replace the old HBM transpose.
    v_wide = jnp.concatenate(
        [v[:, c].reshape(NT, HW) for c in range(C_IN)], axis=1)   # (NT, DV)

    # Row-stack video rows + face row -> ONE fused encoder/face MXU pass.
    lhs = jnp.concatenate([v_wide, f], axis=0).astype(jnp.bfloat16)  # (NT+N, DV)

    b_encface = bias_ref[:, :ENC_COLS]         # (1, 64)  [b_enc | b_face]
    b_out = bias_ref[:, BIAS_OUT_OFF:]         # (1, M_OUT)

    # VideoExtractor (cols 0:32) and FaceRecognizer (cols 32:64) + ReLU.
    # Off-block entries (video x w_face, face x w_enc) are garbage but get
    # multiplied by the zero blocks of w_head below.
    enc = jnp.maximum(
        jnp.dot(lhs, w_encface_ref[...], preferred_element_type=jnp.float32)
        + b_encface, 0.0)                      # (NT+N, 64) f32
    # (dropout p=0.1 is identity in eval mode)

    # Decoder heads (mel+gate fused column-wise) with block-structured weight
    # [[Wv, 0], [0, Wf]]; single MXU dot, lane-tile-aligned result slices.
    head = jnp.dot(enc.astype(jnp.bfloat16), w_head_ref[...],
                   preferred_element_type=jnp.float32)             # (NT+N, HEAD_COLS)

    video_part = head[:NT, :M_OUT]                                 # (NT, M_OUT)
    face_bias = head[NT:, HEAD_FACE_OFF:] + b_out                  # (N, M_OUT)

    # Per-batch face bias replicated across T via a VPU broadcast-add
    # (replaces the old one-hot f32 matmul).
    out = video_part.reshape(N, T, M_OUT) + face_bias[:, None, :]  # (N, T, M_OUT)
    out_ref[...] = out.astype(out_ref.dtype)


# ------------------------------ params ----------------------------------------
def init_params(key):
    """Raw (PyTorch-like) params plus one-time fused/pre-cast kernel operands."""
    ks = jax.random.split(key, 4)
    scale = 0.02
    raw = dict(
        w_enc=scale * jax.random.normal(ks[0], (DV, C_ENC), jnp.float32),
        b_enc=jnp.zeros((C_ENC,), jnp.float32),
        w_face=scale * jax.random.normal(ks[1], (DF, F_FACE), jnp.float32),
        b_face=jnp.zeros((F_FACE,), jnp.float32),
        w_dec=scale * jax.random.normal(ks[2], (C_ENC + F_FACE, N_MELS), jnp.float32),
        b_dec=jnp.zeros((N_MELS,), jnp.float32),
        w_gate=scale * jax.random.normal(ks[3], (C_ENC + F_FACE, 1), jnp.float32),
        b_gate=jnp.zeros((1,), jnp.float32),
    )

    # ---- fused kernel operands (hoisted out of the per-call forward path) ----
    # Encoder | face weights column-stacked: (DV, 64) bf16.
    w_encface = jnp.concatenate([raw["w_enc"], raw["w_face"]], axis=1
                                ).astype(jnp.bfloat16)

    # Decoder mel+gate fused column-wise, then block-structured:
    #   rows 0:32  (video feats) -> cols [0:M_OUT)                 = Wv
    #   rows 32:64 (face feats)  -> cols [HEAD_FACE_OFF:+M_OUT)    = Wf
    # Zero blocks kill the garbage cross terms of the fused encoder output.
    w_out = jnp.concatenate(
        [raw["w_dec"], raw["w_gate"]], axis=1)                     # (64, M_OUT)
    w_head = jnp.zeros((ENC_COLS, HEAD_COLS), jnp.float32)
    w_head = w_head.at[:C_ENC, :M_OUT].set(w_out[:C_ENC])
    w_head = w_head.at[C_ENC:, HEAD_FACE_OFF:].set(w_out[C_ENC:])
    w_head = w_head.astype(jnp.bfloat16)

    # All biases coalesced into one row (decoder bias at a lane-tile boundary).
    b_out = jnp.concatenate([raw["b_dec"], raw["b_gate"]])         # (M_OUT,)
    bias = jnp.zeros((1, BIAS_COLS), jnp.float32)
    bias = bias.at[0, :C_ENC].set(raw["b_enc"])
    bias = bias.at[0, C_ENC:ENC_COLS].set(raw["b_face"])
    bias = bias.at[0, BIAS_OUT_OFF:].set(b_out)

    return dict(raw=raw, w_encface=w_encface, w_head=w_head, bias=bias)


# ------------------------------ wrapper ---------------------------------------
def lip2speech_forward(params, video_frames, face_frames, audio_frames,
                       melspecs, video_lengths, audio_lengths,
                       melspec_lengths, tf_ratio):
    # audio_frames / melspecs / tf_ratio accepted for signature parity.
    # TODO(synk): teacher-forced autoregressive attention Decoder not modeled.
    del audio_frames, melspecs, audio_lengths, melspec_lengths, tf_ratio

    n, c, t, h, w = video_frames.shape
    assert (n, c, t, h, w) == (N, C_IN, T, H, W)

    # Metadata-only reshapes (no HBM copies); layout reorder happens in VMEM.
    vid = video_frames.reshape(N, C_IN, T, HW)
    face = face_frames.reshape(N, face_frames.shape[1], DF)

    vmem = lambda: pl.BlockSpec(memory_space=pltpu.MemorySpace.VMEM)
    out3 = pl.pallas_call(
        lip2speech_kernel,
        out_shape=jax.ShapeDtypeStruct((N, T, M_OUT), jnp.float32),
        in_specs=[vmem() for _ in range(5)],
        out_specs=vmem(),
    )(vid, face, params["w_encface"], params["w_head"], params["bias"])

    mel_out = out3[..., :N_MELS]           # (N, T, N_MELS)
    gate_out = out3[..., N_MELS:]          # (N, T, 1) — pre-sigmoid logits
    encoder_lengths = video_lengths
    # forward returns: decoder outputs + [encoder_lengths]
    return [mel_out, gate_out, encoder_lengths]


# ------------------------------ reference -------------------------------------
def lip2speech_reference(raw, video_frames, face_frames):
    """Pure-JAX f32 reference of the same surrogate forward pass."""
    vid = jnp.transpose(video_frames, (0, 2, 1, 3, 4)).reshape(NT, DV)
    face = face_frames[:, 0].reshape(N, DF)
    video_feat = jax.nn.relu(vid @ raw["w_enc"] + raw["b_enc"])        # (NT, C_ENC)
    face_feat = jax.nn.relu(face @ raw["w_face"] + raw["b_face"])      # (N, F_FACE)
    face_rep = jnp.repeat(face_feat, T, axis=0)                        # (NT, F_FACE)
    vis = jnp.concatenate([video_feat, face_rep], axis=1)              # (NT, 64)
    mel = vis @ raw["w_dec"] + raw["b_dec"]
    gate = vis @ raw["w_gate"] + raw["b_gate"]
    return mel.reshape(N, T, N_MELS), gate.reshape(N, T, 1)


# ------------------------------ main -----------------------------------------
if __name__ == "__main__":
    key = jax.random.PRNGKey(0)
    k_vid, k_face, k_aud, k_mel = jax.random.split(key, 4)

    video_frames = jax.random.normal(k_vid, (N, C_IN, T, H, W), jnp.float32)
    face_frames = jax.random.normal(k_face, (N, 2, C_IN, H, W), jnp.float32)
    audio_frames = jax.random.normal(k_aud, (N, 64), jnp.float32)
    melspecs = jax.random.normal(k_mel, (N, N_MELS, T_MEL), jnp.float32)
    video_lengths = jnp.full((N,), T, jnp.int32)
    audio_lengths = jnp.full((N,), 64, jnp.int32)
    melspec_lengths = jnp.full((N,), T_MEL, jnp.int32)
    tf_ratio = 1.0

    params = init_params(jax.random.PRNGKey(42))

    outputs = lip2speech_forward(params, video_frames, face_frames, audio_frames,
                                 melspecs, video_lengths, audio_lengths,
                                 melspec_lengths, tf_ratio)
    jax.block_until_ready(outputs)

    mel_out, gate_out, enc_len = outputs
    assert mel_out.shape == (N, T, N_MELS)
    assert gate_out.shape == (N, T, 1)
    assert enc_len.shape == (N,)

    # Numerical check vs. pure-JAX f32 reference (bf16 MXU inputs -> loose tol).
    mel_ref, gate_ref = lip2speech_reference(params["raw"], video_frames, face_frames)
    assert bool(jnp.allclose(mel_out, mel_ref, rtol=5e-2, atol=1e-2))
    assert bool(jnp.allclose(gate_out, gate_ref, rtol=5e-2, atol=1e-2))

    print("KERNEL_OK")
</pallas_src>

<mosaic_0001>
module attributes {stable_mosaic.version = 11 : i64} {
  func.func @lip2speech_kernel(%arg0: memref<2x3x8x256xf32, #tpu.memory_space<vmem>>, %arg1: memref<2x2x768xf32, #tpu.memory_space<vmem>>, %arg2: memref<768x64xbf16, #tpu.memory_space<vmem>>, %arg3: memref<64x145xbf16, #tpu.memory_space<vmem>>, %arg4: memref<1x145xf32, #tpu.memory_space<vmem>>, %arg5: memref<2x8x17xf32, #tpu.memory_space<vmem>>) attributes {dimension_semantics = [], scalar_prefetch = 0 : i64, scratch_operands = 0 : i64, tpu.core_type = #tpu.core_type<tc>} {
    %c0 = arith.constant 0 : index
    %c0_0 = arith.constant 0 : index
    %c0_1 = arith.constant 0 : index
    %c0_2 = arith.constant 0 : index
    %0 = vector.load %arg0[%c0, %c0_0, %c0_1, %c0_2] : memref<2x3x8x256xf32, #tpu.memory_space<vmem>>, vector<2x3x8x256xf32>
    %c0_3 = arith.constant 0 : index
    %c0_4 = arith.constant 0 : index
    %c0_5 = arith.constant 0 : index
    %1 = vector.load %arg1[%c0_3, %c0_4, %c0_5] : memref<2x2x768xf32, #tpu.memory_space<vmem>>, vector<2x2x768xf32>
    %2 = vector.extract_strided_slice %1 {offsets = [0, 0, 0], sizes = [2, 1, 768], strides = [1, 1, 1]} : vector<2x2x768xf32> to vector<2x1x768xf32>
    %3 = vector.shape_cast %2 : vector<2x1x768xf32> to vector<2x768xf32>
    %4 = vector.extract_strided_slice %0 {offsets = [0, 0, 0, 0], sizes = [2, 1, 8, 256], strides = [1, 1, 1, 1]} : vector<2x3x8x256xf32> to vector<2x1x8x256xf32>
    %5 = vector.shape_cast %4 : vector<2x1x8x256xf32> to vector<2x8x256xf32>
    %6 = vector.shape_cast %5 : vector<2x8x256xf32> to vector<16x256xf32>
    %7 = vector.extract_strided_slice %0 {offsets = [0, 1, 0, 0], sizes = [2, 1, 8, 256], strides = [1, 1, 1, 1]} : vector<2x3x8x256xf32> to vector<2x1x8x256xf32>
    %8 = vector.shape_cast %7 : vector<2x1x8x256xf32> to vector<2x8x256xf32>
    %9 = vector.shape_cast %8 : vector<2x8x256xf32> to vector<16x256xf32>
    %10 = vector.extract_strided_slice %0 {offsets = [0, 2, 0, 0], sizes = [2, 1, 8, 256], strides = [1, 1, 1, 1]} : vector<2x3x8x256xf32> to vector<2x1x8x256xf32>
    %11 = vector.shape_cast %10 : vector<2x1x8x256xf32> to vector<2x8x256xf32>
    %12 = vector.shape_cast %11 : vector<2x8x256xf32> to vector<16x256xf32>
    %13 = tpu.concatenate %6, %9, %12 in 1 : vector<16x256xf32>, vector<16x256xf32>, vector<16x256xf32> -> vector<16x768xf32>
    %14 = tpu.concatenate %13, %3 in 0 : vector<16x768xf32>, vector<2x768xf32> -> vector<18x768xf32>
    %15 = arith.truncf %14 : vector<18x768xf32> to vector<18x768xbf16>
    %c0_6 = arith.constant 0 : index
    %c0_7 = arith.constant 0 : index
    %16 = vector.load %arg4[%c0_6, %c0_7] : memref<1x145xf32, #tpu.memory_space<vmem>>, vector<1x64xf32>
    %c0_8 = arith.constant 0 : index
    %c128 = arith.constant 128 : index
    %17 = vector.load %arg4[%c0_8, %c128] : memref<1x145xf32, #tpu.memory_space<vmem>>, vector<1x17xf32>
    %c0_9 = arith.constant 0 : index
    %c0_10 = arith.constant 0 : index
    %18 = vector.load %arg2[%c0_9, %c0_10] : memref<768x64xbf16, #tpu.memory_space<vmem>>, vector<768x64xbf16>
    %cst = arith.constant dense<0.000000e+00> : vector<18x64xf32>
    %19 = tpu.matmul %15, %18, %cst {dimension_numbers = #tpu.dot_dimension_numbers<[1], [0], [0], [1], [0, 0, 1, 1], [], []>} : vector<18x768xbf16>, vector<768x64xbf16>, vector<18x64xf32> -> vector<18x64xf32>
    %20 = vector.broadcast %16 : vector<1x64xf32> to vector<18x64xf32>
    %21 = arith.addf %19, %20 : vector<18x64xf32>
    %cst_11 = arith.constant 0.000000e+00 : f32
    %22 = vector.broadcast %cst_11 : f32 to vector<18x64xf32>
    %23 = arith.maximumf %21, %22 : vector<18x64xf32>
    %24 = arith.truncf %23 : vector<18x64xf32> to vector<18x64xbf16>
    %c0_12 = arith.constant 0 : index
    %c0_13 = arith.constant 0 : index
    %25 = vector.load %arg3[%c0_12, %c0_13] : memref<64x145xbf16, #tpu.memory_space<vmem>>, vector<64x145xbf16>
    %cst_14 = arith.constant dense<0.000000e+00> : vector<18x145xf32>
    %26 = tpu.matmul %24, %25, %cst_14 {dimension_numbers = #tpu.dot_dimension_numbers<[1], [0], [0], [1], [0, 0, 1, 1], [], []>} : vector<18x64xbf16>, vector<64x145xbf16>, vector<18x145xf32> -> vector<18x145xf32>
    %27 = vector.extract_strided_slice %26 {offsets = [0, 0], sizes = [16, 17], strides = [1, 1]} : vector<18x145xf32> to vector<16x17xf32>
    %28 = vector.extract_strided_slice %26 {offsets = [16, 128], sizes = [2, 17], strides = [1, 1]} : vector<18x145xf32> to vector<2x17xf32>
    %29 = vector.broadcast %17 : vector<1x17xf32> to vector<2x17xf32>
    %30 = arith.addf %28, %29 : vector<2x17xf32>
    %31 = vector.shape_cast %27 : vector<16x17xf32> to vector<2x8x17xf32>
    %32 = vector.shape_cast %30 : vector<2x17xf32> to vector<2x1x17xf32>
    %33 = vector.broadcast %32 : vector<2x1x17xf32> to vector<2x8x17xf32>
    %34 = arith.addf %31, %33 : vector<2x8x17xf32>
    %c0_15 = arith.constant 0 : index
    %c0_16 = arith.constant 0 : index
    %c0_17 = arith.constant 0 : index
    %35 = vector.load %arg5[%c0_15, %c0_16, %c0_17] : memref<2x8x17xf32, #tpu.memory_space<vmem>>, vector<2x8x17xf32>
    tpu.vector_store %arg5[%c0_15, %c0_16, %c0_17], %34 {strides = array<i32>} : memref<2x8x17xf32, #tpu.memory_space<vmem>>, vector<2x8x17xf32>,
    return
  }
}

</mosaic_0001>

<llo_original>
// kernel: tpu_custom_call.1
$region0: #{tpu_custom_call.1}
  #allocation0 [shape = 'u32[]', space=smem, size = 0x4, offset = 0x4, fixed_abs, tag = 'smem constant byte address 0x4 - core index']
  #allocation1 [shape = 'u32[144,128]{1,0:T(1,128)}', space=vmem, size = 0x12000, scoped, tag = 'internal scratch']
  %s0 = inlined_call_operand.vmem [shape: f32[2,3,8,256], index: 0, kind: input, shape index: {}]
  %s1 = inlined_call_operand.vmem [shape: f32[2,2,768], index: 1, kind: input, shape index: {}]
  %s2 = inlined_call_operand.vmem [shape: bf16[768,64], index: 2, kind: input, shape index: {}]
  %s3 = inlined_call_operand.vmem [shape: bf16[64,145], index: 3, kind: input, shape index: {}]
  %s4 = inlined_call_operand.vmem [shape: f32[1,145], index: 4, kind: input, shape index: {}]
  %s5 = inlined_call_operand.hbm [shape: f32[2,8,17], index: 5, kind: output, shape index: {}]
  %s6 = sld [smem:[#allocation0]]
  $region30: #{tpu_custom_call.1} parent=0
    _
  %s8 = ssub.s32 1, %s6
  %s9 = scalar_select 0, %s8, %s6
  $region1: #{tpu_custom_call.1} parent=0
    #allocation2 [shape = 'u8[8192]{0}', space=vmem, size = 0x2000, scoped, tag = 'output window, operand 0, single buffered']
    #allocation3 [shape = 's32[1]{0}', space=sflag, size = 0x4, scoped, tag = 'scoped memory for tpu_custom_call.1']
    %10 = vsyncpa [#allocation3], 0
    // Predicated region
    $region2: #{tpu_custom_call.1} parent=1 // pred_check
      _
    $region3: #{tpu_custom_call.1} parent=1 // pred_check_branch
      %12 = sbr.rel (0) target = $region5
    $region4: #{tpu_custom_call.1} parent=1 // pred_region
      _
    $region5: #{tpu_custom_call.1} parent=1 // pred_fallthru
      _
    // Predicated region
    $region6: #{tpu_custom_call.1} parent=1 // pred_check
      _
    $region7: #{tpu_custom_call.1} parent=1 // pred_check_branch
      %14 = sbr.rel (0) target = $region9
    $region8: #{tpu_custom_call.1} parent=1 // pred_region
      _
    $region9: #{tpu_custom_call.1} parent=1 // pred_fallthru
      _
    // Predicated region
    $region10: #{tpu_custom_call.1} parent=1 // pred_check
      _
    $region11: #{tpu_custom_call.1} parent=1 // pred_check_branch
      %16 = sbr.rel (0) target = $region13
    $region12: #{tpu_custom_call.1} parent=1 // pred_region
      _
    $region13: #{tpu_custom_call.1} parent=1 // pred_fallthru
      _
    // Predicated region
    $region14: #{tpu_custom_call.1} parent=1 // pred_check
      _
    $region15: #{tpu_custom_call.1} parent=1 // pred_check_branch
      %18 = sbr.rel (0) target = $region17
    $region16: #{tpu_custom_call.1} parent=1 // pred_region
      _
    $region17: #{tpu_custom_call.1} parent=1 // pred_fallthru
      _
    // Predicated region
    $region18: #{tpu_custom_call.1} parent=1 // pred_check
      _
    $region19: #{tpu_custom_call.1} parent=1 // pred_check_branch
      %20 = sbr.rel (0) target = $region21
    $region20: #{tpu_custom_call.1} parent=1 // pred_region
      _
    $region21: #{tpu_custom_call.1} parent=1 // pred_fallthru
      _
    %v22 = vld [vmem:[%s0] sm:$0xff]
    %v23 = vld [vmem:[%s0 + $0x8] sm:$0xff]
    %v24 = vld [vmem:[%s0 + $0x10] sm:$0xff]
    %v25 = vld [vmem:[%s0 + $0x18] sm:$0xff]
    %v26 = vld [vmem:[%s0 + $0x20] sm:$0xff]
    %v27 = vld [vmem:[%s0 + $0x28] sm:$0xff]
    %v28 = vld [vmem:[%s0 + $0x30] sm:$0xff]
    %v29 = vld [vmem:[%s0 + $0x38] sm:$0xff]
    %v30 = vld [vmem:[%s0 + $0x40] sm:$0xff]
    %v31 = vld [vmem:[%s0 + $0x48] sm:$0xff]
    %v32 = vld [vmem:[%s0 + $0x50] sm:$0xff]
    %v33 = vld [vmem:[%s0 + $0x58] sm:$0xff]
    %v34 = vld [vmem:[%s1] sm:$0xff]
    %v35 = vld [vmem:[%s1 + $0x8] sm:$0xf]
    %v36 = vld [vmem:[%s1 + $0xc] sm:$0xff]
    %v37 = vld [vmem:[%s1 + $0x14] sm:$0xf]
    %v42 = vlaneseq
    %v43 = vshrl.u32 %v42, 7
    %v44 = vsub.s32 0, %v43
    %v45 = vrot.slane %v34, %v44
    %v46 = vlaneseq
    %v47 = vshrl.u32 %v46, 7
    %v48 = vsub.s32 2, %v47
    %v49 = vrot.slane %v34, %v48
    %v50 = vlaneseq
    %v51 = vshrl.u32 %v50, 7
    %v52 = vsub.s32 4, %v51
    %v53 = vrot.slane %v34, %v52
    %v54 = vlaneseq
    %v55 = vshrl.u32 %v54, 7
    %v56 = vsub.s32 6, %v55
    %v57 = vrot.slane %v34, %v56
    %v58 = vlaneseq
    %v59 = vshrl.u32 %v58, 7
    %v60 = vsub.s32 0, %v59
    %v61 = vrot.slane %v35, %v60
    %v62 = vlaneseq
    %v63 = vshrl.u32 %v62, 7
    %v64 = vsub.s32 2, %v63
    %v65 = vrot.slane %v35, %v64
    %v66 = vlaneseq
    %v67 = vshrl.u32 %v66, 7
    %v68 = vsub.s32 0, %v67
    %v69 = vrot.slane %v36, %v68
    %v70 = vlaneseq
    %v71 = vshrl.u32 %v70, 7
    %v72 = vsub.s32 2, %v71
    %v73 = vrot.slane %v36, %v72
    %v74 = vlaneseq
    %v75 = vshrl.u32 %v74, 7
    %v76 = vsub.s32 4, %v75
    %v77 = vrot.slane %v36, %v76
    %v78 = vlaneseq
    %v79 = vshrl.u32 %v78, 7
    %v80 = vsub.s32 6, %v79
    %v81 = vrot.slane %v36, %v80
    %v82 = vlaneseq
    %v83 = vshrl.u32 %v82, 7
    %v84 = vsub.s32 0, %v83
    %v85 = vrot.slane %v37, %v84
    %v86 = vlaneseq
    %v87 = vshrl.u32 %v86, 7
    %v88 = vsub.s32 2, %v87
    %v89 = vrot.slane %v37, %v88
    %vm90 = vcmask 1041409
    %v91 = vsel %vm90, %v69, %v45
    %v92 = vsel %vm90, %v73, %v49
    %v93 = vsel %vm90, %v77, %v53
    %v94 = vsel %vm90, %v81, %v57
    %v95 = vsel %vm90, %v85, %v61
    %v96 = vsel %vm90, %v89, %v65
    %v103 = vpack.c.bf16 %v28, %v22
    %v104 = vpack.c.bf16 %v29, %v23
    %v105 = vpack.c.bf16 %v30, %v24
    %v106 = vpack.c.bf16 %v31, %v25
    %v107 = vpack.c.bf16 %v32, %v26
    %v108 = vpack.c.bf16 %v33, %v27
    %v109 = vpack.c.bf16 %v91, %v91
    %v110 = vpack.c.bf16 %v92, %v92
    %v111 = vpack.c.bf16 %v93, %v93
    %v112 = vpack.c.bf16 %v94, %v94
    %v113 = vpack.c.bf16 %v95, %v95
    %v114 = vpack.c.bf16 %v96, %v96
    %v115 = vld [vmem:[%s4] sm:$0x1]
    %v116 = vld [vmem:[%s4 + $0x1] sm:$0x1]
    %v117 = vld [vmem:[%s2] sm:$0xf]
    %v118 = vld [vmem:[%s2 + $0x4] sm:$0xf]
    %v119 = vld [vmem:[%s2 + $0x8] sm:$0xf]
    %v120 = vld [vmem:[%s2 + $0xc] sm:$0xf]
    %v121 = vld [vmem:[%s2 + $0x10] sm:$0xf]
    %v122 = vld [vmem:[%s2 + $0x14] sm:$0xf]
    %v123 = vld [vmem:[%s2 + $0x18] sm:$0xf]
    %v124 = vld [vmem:[%s2 + $0x1c] sm:$0xf]
    %v125 = vld [vmem:[%s2 + $0x20] sm:$0xf]
    %v126 = vld [vmem:[%s2 + $0x24] sm:$0xf]
    %v127 = vld [vmem:[%s2 + $0x28] sm:$0xf]
    %v128 = vld [vmem:[%s2 + $0x2c] sm:$0xf]
    %v129 = vld [vmem:[%s2 + $0x30] sm:$0xf]
    %v130 = vld [vmem:[%s2 + $0x34] sm:$0xf]
    %v131 = vld [vmem:[%s2 + $0x38] sm:$0xf]
    %v132 = vld [vmem:[%s2 + $0x3c] sm:$0xf]
    %v133 = vld [vmem:[%s2 + $0x40] sm:$0xf]
    %v134 = vld [vmem:[%s2 + $0x44] sm:$0xf]
    %v135 = vld [vmem:[%s2 + $0x48] sm:$0xf]
    %v136 = vld [vmem:[%s2 + $0x4c] sm:$0xf]
    %v137 = vld [vmem:[%s2 + $0x50] sm:$0xf]
    %v138 = vld [vmem:[%s2 + $0x54] sm:$0xf]
    %v139 = vld [vmem:[%s2 + $0x58] sm:$0xf]
    %v140 = vld [vmem:[%s2 + $0x5c] sm:$0xf]
    %v141 = vld [vmem:[%s2 + $0x60] sm:$0xf]
    %v142 = vld [vmem:[%s2 + $0x64] sm:$0xf]
    %v143 = vld [vmem:[%s2 + $0x68] sm:$0xf]
    %v144 = vld [vmem:[%s2 + $0x6c] sm:$0xf]
    %v145 = vld [vmem:[%s2 + $0x70] sm:$0xf]
    %v146 = vld [vmem:[%s2 + $0x74] sm:$0xf]
    %v147 = vld [vmem:[%s2 + $0x78] sm:$0xf]
    %v148 = vld [vmem:[%s2 + $0x7c] sm:$0xf]
    %v149 = vld [vmem:[%s2 + $0x80] sm:$0xf]
    %v150 = vld [vmem:[%s2 + $0x84] sm:$0xf]
    %v151 = vld [vmem:[%s2 + $0x88] sm:$0xf]
    %v152 = vld [vmem:[%s2 + $0x8c] sm:$0xf]
    %v153 = vld [vmem:[%s2 + $0x90] sm:$0xf]
    %v154 = vld [vmem:[%s2 + $0x94] sm:$0xf]
    %v155 = vld [vmem:[%s2 + $0x98] sm:$0xf]
    %v156 = vld [vmem:[%s2 + $0x9c] sm:$0xf]
    %v157 = vld [vmem:[%s2 + $0xa0] sm:$0xf]
    %v158 = vld [vmem:[%s2 + $0xa4] sm:$0xf]
    %v159 = vld [vmem:[%s2 + $0xa8] sm:$0xf]
    %v160 = vld [vmem:[%s2 + $0xac] sm:$0xf]
    %v161 = vld [vmem:[%s2 + $0xb0] sm:$0xf]
    %v162 = vld [vmem:[%s2 + $0xb4] sm:$0xf]
    %v163 = vld [vmem:[%s2 + $0xb8] sm:$0xf]
    %v164 = vld [vmem:[%s2 + $0xbc] sm:$0xf]
    %v165 = vld [vmem:[%s2 + $0xc0] sm:$0xf]
    %v166 = vld [vmem:[%s2 + $0xc4] sm:$0xf]
    %v167 = vld [vmem:[%s2 + $0xc8] sm:$0xf]
    %v168 = vld [vmem:[%s2 + $0xcc] sm:$0xf]
    %v169 = vld [vmem:[%s2 + $0xd0] sm:$0xf]
    %v170 = vld [vmem:[%s2 + $0xd4] sm:$0xf]
    %v171 = vld [vmem:[%s2 + $0xd8] sm:$0xf]
    %v172 = vld [vmem:[%s2 + $0xdc] sm:$0xf]
    %v173 = vld [vmem:[%s2 + $0xe0] sm:$0xf]
    %v174 = vld [vmem:[%s2 + $0xe4] sm:$0xf]
    %v175 = vld [vmem:[%s2 + $0xe8] sm:$0xf]
    %v176 = vld [vmem:[%s2 + $0xec] sm:$0xf]
    %v177 = vld [vmem:[%s2 + $0xf0] sm:$0xf]
    %v178 = vld [vmem:[%s2 + $0xf4] sm:$0xf]
    %v179 = vld [vmem:[%s2 + $0xf8] sm:$0xf]
    %v180 = vld [vmem:[%s2 + $0xfc] sm:$0xf]
    %v181 = vld [vmem:[%s2 + $0x100] sm:$0xf]
    %v182 = vld [vmem:[%s2 + $0x104] sm:$0xf]
    %v183 = vld [vmem:[%s2 + $0x108] sm:$0xf]
    %v184 = vld [vmem:[%s2 + $0x10c] sm:$0xf]
    %v185 = vld [vmem:[%s2 + $0x110] sm:$0xf]
    %v186 = vld [vmem:[%s2 + $0x114] sm:$0xf]
    %v187 = vld [vmem:[%s2 + $0x118] sm:$0xf]
    %v188 = vld [vmem:[%s2 + $0x11c] sm:$0xf]
    %v189 = vld [vmem:[%s2 + $0x120] sm:$0xf]
    %v190 = vld [vmem:[%s2 + $0x124] sm:$0xf]
    %v191 = vld [vmem:[%s2 + $0x128] sm:$0xf]
    %v192 = vld [vmem:[%s2 + $0x12c] sm:$0xf]
    %v193 = vld [vmem:[%s2 + $0x130] sm:$0xf]
    %v194 = vld [vmem:[%s2 + $0x134] sm:$0xf]
    %v195 = vld [vmem:[%s2 + $0x138] sm:$0xf]
    %v196 = vld [vmem:[%s2 + $0x13c] sm:$0xf]
    %v197 = vld [vmem:[%s2 + $0x140] sm:$0xf]
    %v198 = vld [vmem:[%s2 + $0x144] sm:$0xf]
    %v199 = vld [vmem:[%s2 + $0x148] sm:$0xf]
    %v200 = vld [vmem:[%s2 + $0x14c] sm:$0xf]
    %v201 = vld [vmem:[%s2 + $0x150] sm:$0xf]
    %v202 = vld [vmem:[%s2 + $0x154] sm:$0xf]
    %v203 = vld [vmem:[%s2 + $0x158] sm:$0xf]
    %v204 = vld [vmem:[%s2 + $0x15c] sm:$0xf]
    %v205 = vld [vmem:[%s2 + $0x160] sm:$0xf]
    %v206 = vld [vmem:[%s2 + $0x164] sm:$0xf]
    %v207 = vld [vmem:[%s2 + $0x168] sm:$0xf]
    %v208 = vld [vmem:[%s2 + $0x16c] sm:$0xf]
    %v209 = vld [vmem:[%s2 + $0x170] sm:$0xf]
    %v210 = vld [vmem:[%s2 + $0x174] sm:$0xf]
    %v211 = vld [vmem:[%s2 + $0x178] sm:$0xf]
    %v212 = vld [vmem:[%s2 + $0x17c] sm:$0xf]
    %v214 = vlaneseq
    %v215 = vshrl.u32 %v214, 7
    %v216 = vsub.s32 0, %v215
    %v217 = vrot.slane %v115, %v216
    %v315 = vunpack.c.l.b16 %v117
    %v316 = vunpack.c.l.b16 %v118
    %v317 = vunpack.c.l.b16 %v119
    %v318 = vunpack.c.l.b16 %v120
    %v319 = vunpack.c.l.b16 %v121
    %v320 = vunpack.c.l.b16 %v122
    %v321 = vunpack.c.l.b16 %v123
    %v322 = vunpack.c.l.b16 %v124
    %v323 = vunpack.c.l.b16 %v125
    %v324 = vunpack.c.l.b16 %v126
    %v325 = vunpack.c.l.b16 %v127
    %v326 = vunpack.c.l.b16 %v128
    %v327 = vunpack.c.l.b16 %v129
    %v328 = vunpack.c.l.b16 %v130
    %v329 = vunpack.c.l.b16 %v131
    %v330 = vunpack.c.l.b16 %v132
    %v331 = vunpack.c.l.b16 %v133
    %v332 = vunpack.c.l.b16 %v134
    %v333 = vunpack.c.l.b16 %v135
    %v334 = vunpack.c.l.b16 %v136
    %v335 = vunpack.c.l.b16 %v137
    %v336 = vunpack.c.l.b16 %v138
    %v337 = vunpack.c.l.b16 %v139
    %v338 = vunpack.c.l.b16 %v140
    %v339 = vunpack.c.l.b16 %v141
    %v340 = vunpack.c.l.b16 %v142
    %v341 = vunpack.c.l.b16 %v143
    %v342 = vunpack.c.l.b16 %v144
    %v343 = vunpack.c.l.b16 %v145
    %v344 = vunpack.c.l.b16 %v146
    %v345 = vunpack.c.l.b16 %v147
    %v346 = vunpack.c.l.b16 %v148
    %v347 = vunpack.c.l.b16 %v149
    %v348 = vunpack.c.l.b16 %v150
    %v349 = vunpack.c.l.b16 %v151
    %v350 = vunpack.c.l.b16 %v152
    %v351 = vunpack.c.l.b16 %v153
    %v352 = vunpack.c.l.b16 %v154
    %v353 = vunpack.c.l.b16 %v155
    %v354 = vunpack.c.l.b16 %v156
    %v355 = vunpack.c.l.b16 %v157
    %v356 = vunpack.c.l.b16 %v158
    %v357 = vunpack.c.l.b16 %v159
    %v358 = vunpack.c.l.b16 %v160
    %v359 = vunpack.c.l.b16 %v161
    %v360 = vunpack.c.l.b16 %v162
    %v361 = vunpack.c.l.b16 %v163
    %v362 = vunpack.c.l.b16 %v164
    %v363 = vunpack.c.l.b16 %v165
    %v364 = vunpack.c.l.b16 %v166
    %v365 = vunpack.c.l.b16 %v167
    %v366 = vunpack.c.l.b16 %v168
    %v367 = vunpack.c.l.b16 %v169
    %v368 = vunpack.c.l.b16 %v170
    %v369 = vunpack.c.l.b16 %v171
    %v370 = vunpack.c.l.b16 %v172
    %v371 = vunpack.c.l.b16 %v173
    %v372 = vunpack.c.l.b16 %v174
    %v373 = vunpack.c.l.b16 %v175
    %v374 = vunpack.c.l.b16 %v176
    %v375 = vunpack.c.l.b16 %v177
    %v376 = vunpack.c.l.b16 %v178
    %v377 = vunpack.c.l.b16 %v179
    %v378 = vunpack.c.l.b16 %v180
    %v379 = vunpack.c.l.b16 %v181
    %v380 = vunpack.c.l.b16 %v182
    %v381 = vunpack.c.l.b16 %v183
    %v382 = vunpack.c.l.b16 %v184
    %v383 = vunpack.c.l.b16 %v185
    %v384 = vunpack.c.l.b16 %v186
    %v385 = vunpack.c.l.b16 %v187
    %v386 = vunpack.c.l.b16 %v188
    %v387 = vunpack.c.l.b16 %v189
    %v388 = vunpack.c.l.b16 %v190
    %v389 = vunpack.c.l.b16 %v191
    %v390 = vunpack.c.l.b16 %v192
    %v391 = vunpack.c.l.b16 %v193
    %v392 = vunpack.c.l.b16 %v194
    %v393 = vunpack.c.l.b16 %v195
    %v394 = vunpack.c.l.b16 %v196
    %v395 = vunpack.c.l.b16 %v197
    %v396 = vunpack.c.l.b16 %v198
    %v397 = vunpack.c.l.b16 %v199
    %v398 = vunpack.c.l.b16 %v200
    %v399 = vunpack.c.l.b16 %v201
    %v400 = vunpack.c.l.b16 %v202
    %v401 = vunpack.c.l.b16 %v203
    %v402 = vunpack.c.l.b16 %v204
    %v403 = vunpack.c.l.b16 %v205
    %v404 = vunpack.c.l.b16 %v206
    %v405 = vunpack.c.l.b16 %v207
    %v406 = vunpack.c.l.b16 %v208
    %v407 = vunpack.c.l.b16 %v209
    %v408 = vunpack.c.l.b16 %v210
    %v409 = vunpack.c.l.b16 %v211
    %v410 = vunpack.c.l.b16 %v212
    %v411 = vpack.c.b16 %v316, %v315
    %v412 = vpack.c.b16 %v318, %v317
    %v413 = vpack.c.b16 %v320, %v319
    %v414 = vpack.c.b16 %v322, %v321
    %v415 = vpack.c.b16 %v324, %v323
    %v416 = vpack.c.b16 %v326, %v325
    %v417 = vpack.c.b16 %v328, %v327
    %v418 = vpack.c.b16 %v330, %v329
    %v419 = vpack.c.b16 %v332, %v331
    %v420 = vpack.c.b16 %v334, %v333
    %v421 = vpack.c.b16 %v336, %v335
    %v422 = vpack.c.b16 %v338, %v337
    %v423 = vpack.c.b16 %v340, %v339
    %v424 = vpack.c.b16 %v342, %v341
    %v425 = vpack.c.b16 %v344, %v343
    %v426 = vpack.c.b16 %v346, %v345
    %v427 = vpack.c.b16 %v348, %v347
    %v428 = vpack.c.b16 %v350, %v349
    %v429 = vpack.c.b16 %v352, %v351
    %v430 = vpack.c.b16 %v354, %v353
    %v431 = vpack.c.b16 %v356, %v355
    %v432 = vpack.c.b16 %v358, %v357
    %v433 = vpack.c.b16 %v360, %v359
    %v434 = vpack.c.b16 %v362, %v361
    %v435 = vpack.c.b16 %v364, %v363
    %v436 = vpack.c.b16 %v366, %v365
    %v437 = vpack.c.b16 %v368, %v367
    %v438 = vpack.c.b16 %v370, %v369
    %v439 = vpack.c.b16 %v372, %v371
    %v440 = vpack.c.b16 %v374, %v373
    %v441 = vpack.c.b16 %v376, %v375
    %v442 = vpack.c.b16 %v378, %v377
    %v443 = vpack.c.b16 %v380, %v379
    %v444 = vpack.c.b16 %v382, %v381
    %v445 = vpack.c.b16 %v384, %v383
    %v446 = vpack.c.b16 %v386, %v385
    %v447 = vpack.c.b16 %v388, %v387
    %v448 = vpack.c.b16 %v390, %v389
    %v449 = vpack.c.b16 %v392, %v391
    %v450 = vpack.c.b16 %v394, %v393
    %v451 = vpack.c.b16 %v396, %v395
    %v452 = vpack.c.b16 %v398, %v397
    %v453 = vpack.c.b16 %v400, %v399
    %v454 = vpack.c.b16 %v402, %v401
    %v455 = vpack.c.b16 %v404, %v403
    %v456 = vpack.c.b16 %v406, %v405
    %v457 = vpack.c.b16 %v408, %v407
    %v458 = vpack.c.b16 %v410, %v409
    %507 = vmatprep.subr.bf16.mxu0 0
    %508 = vmatpush1.bf16.msra.mxu0 %v418
    %509 = vmatprep.subr.bf16.mxu0 0
    %510 = vmatpush1.bf16.msra.mxu0 %v417
    %511 = vmatprep.subr.bf16.mxu0 0
    %512 = vmatpush1.bf16.msra.mxu0 %v416
    %513 = vmatprep.subr.bf16.mxu0 0
    %514 = vmatpush1.bf16.msra.mxu0 %v415
    %515 = vmatprep.subr.bf16.mxu0 0
    %516 = vmatpush1.bf16.msra.mxu0 %v414
    %517 = vmatprep.subr.bf16.mxu0 0
    %518 = vmatpush1.bf16.msra.mxu0 %v413
    %519 = vmatprep.subr.bf16.mxu0 0
    %520 = vmatpush1.bf16.msra.mxu0 %v412
    %521 = vmatprep.subr.bf16.mxu0 0
    %522 = vmatpush1.bf16.msra.mxu0 %v411
    %523 = vmatprep.subr.bf16.mxu0 0
    %524 = vmatpush2.bf16.msra.mxu0 %v426
    %525 = vmatprep.subr.bf16.mxu0 0
    %526 = vmatpush2.bf16.msra.mxu0 %v425
    %527 = vmatprep.subr.bf16.mxu0 0
    %528 = vmatpush2.bf16.msra.mxu0 %v424
    %529 = vmatprep.subr.bf16.mxu0 0
    %530 = vmatpush2.bf16.msra.mxu0 %v423
    %531 = vmatprep.subr.bf16.mxu0 0
    %532 = vmatpush2.bf16.msra.mxu0 %v422
    %533 = vmatprep.subr.bf16.mxu0 0
    %534 = vmatpush2.bf16.msra.mxu0 %v421
    %535 = vmatprep.subr.bf16.mxu0 0
    %536 = vmatpush2.bf16.msra.mxu0 %v420
    %537 = vmatprep.subr.bf16.mxu0 0
    %538 = vmatpush2.bf16.msra.mxu0 %v419
    %539 = vmatprep.mubr.bf16.mxu0 %v104
    %540 = vmatmul.mubr.bf16.gmra.mxu0 %v103
    %v541 = vpop.f32.mrf.mxu0
    %v542 = vadd.f32 %v217, %v541
    %v543 = vpop.f32.mrf.mxu0
    %v544 = vpop.f32.mrf.mxu0
    %v545 = vadd.f32 %v217, %v544
    %v546 = vpop.f32.mrf.mxu0
    %547 = vmatprep.mubr.bf16.mxu0 %v110
    %548 = vmatmul.mubr.bf16.gmra.mxu0 %v109
    %v549 = vpop.f32.mrf.mxu0
    %v550 = vadd.f32 %v217, %v549
    %v551 = vpop.f32.mrf.mxu0
    %v552 = vpop.f32.mrf.mxu0
    %v553 = vpop.f32.mrf.mxu0
    %554 = vdwg.mxu0
    %555 = vmatprep.subr.bf16.mxu0 0
    %556 = vmatpush1.bf16.msra.mxu0 %v434
    %557 = vmatprep.subr.bf16.mxu0 0
    %558 = vmatpush1.bf16.msra.mxu0 %v433
    %559 = vmatprep.subr.bf16.mxu0 0
    %560 = vmatpush1.bf16.msra.mxu0 %v432
    %561 = vmatprep.subr.bf16.mxu0 0
    %562 = vmatpush1.bf16.msra.mxu0 %v431
    %563 = vmatprep.subr.bf16.mxu0 0
    %564 = vmatpush1.bf16.msra.mxu0 %v430
    %565 = vmatprep.subr.bf16.mxu0 0
    %566 = vmatpush1.bf16.msra.mxu0 %v429
    %567 = vmatprep.subr.bf16.mxu0 0
    %568 = vmatpush1.bf16.msra.mxu0 %v428
    %569 = vmatprep.subr.bf16.mxu0 0
    %570 = vmatpush1.bf16.msra.mxu0 %v427
    %571 = vmatprep.subr.bf16.mxu0 0
    %572 = vmatpush2.bf16.msra.mxu0 %v442
    %573 = vmatprep.subr.bf16.mxu0 0
    %574 = vmatpush2.bf16.msra.mxu0 %v441
    %575 = vmatprep.subr.bf16.mxu0 0
    %576 = vmatpush2.bf16.msra.mxu0 %v440
    %577 = vmatprep.subr.bf16.mxu0 0
    %578 = vmatpush2.bf16.msra.mxu0 %v439
    %579 = vmatprep.subr.bf16.mxu0 0
    %580 = vmatpush2.bf16.msra.mxu0 %v438
    %581 = vmatprep.subr.bf16.mxu0 0
    %582 = vmatpush2.bf16.msra.mxu0 %v437
    %583 = vmatprep.subr.bf16.mxu0 0
    %584 = vmatpush2.bf16.msra.mxu0 %v436
    %585 = vmatprep.subr.bf16.mxu0 0
    %586 = vmatpush2.bf16.msra.mxu0 %v435
    %587 = vmatprep.mubr.bf16.mxu0 %v106
    %588 = vmatmul.mubr.bf16.gmra.mxu0 %v105
    %v589 = vpop.f32.mrf.mxu0
    %v590 = vadd.f32 %v542, %v589
    %v591 = vpop.f32.mrf.mxu0
    %v592 = vpop.f32.mrf.mxu0
    %v593 = vadd.f32 %v545, %v592
    %v594 = vpop.f32.mrf.mxu0
    %595 = vmatprep.mubr.bf16.mxu0 %v112
    %596 = vmatmul.mubr.bf16.gmra.mxu0 %v111
    %v597 = vpop.f32.mrf.mxu0
    %v598 = vadd.f32 %v550, %v597
    %v599 = vpop.f32.mrf.mxu0
    %v600 = vpop.f32.mrf.mxu0
    %v601 = vpop.f32.mrf.mxu0
    %602 = vdwg.mxu0
    %603 = vmatprep.subr.bf16.mxu0 0
    %604 = vmatpush1.bf16.msra.mxu0 %v450
    %605 = vmatprep.subr.bf16.mxu0 0
    %606 = vmatpush1.bf16.msra.mxu0 %v449
    %607 = vmatprep.subr.bf16.mxu0 0
    %608 = vmatpush1.bf16.msra.mxu0 %v448
    %609 = vmatprep.subr.bf16.mxu0 0
    %610 = vmatpush1.bf16.msra.mxu0 %v447
    %611 = vmatprep.subr.bf16.mxu0 0
    %612 = vmatpush1.bf16.msra.mxu0 %v446
    %613 = vmatprep.subr.bf16.mxu0 0
    %614 = vmatpush1.bf16.msra.mxu0 %v445
    %615 = vmatprep.subr.bf16.mxu0 0
    %616 = vmatpush1.bf16.msra.mxu0 %v444
    %617 = vmatprep.subr.bf16.mxu0 0
    %618 = vmatpush1.bf16.msra.mxu0 %v443
    %619 = vmatprep.subr.bf16.mxu0 0
    %620 = vmatpush2.bf16.msra.mxu0 %v458
    %621 = vmatprep.subr.bf16.mxu0 0
    %622 = vmatpush2.bf16.msra.mxu0 %v457
    %623 = vmatprep.subr.bf16.mxu0 0
    %624 = vmatpush2.bf16.msra.mxu0 %v456
    %625 = vmatprep.subr.bf16.mxu0 0
    %626 = vmatpush2.bf16.msra.mxu0 %v455
    %627 = vmatprep.subr.bf16.mxu0 0
    %628 = vmatpush2.bf16.msra.mxu0 %v454
    %629 = vmatprep.subr.bf16.mxu0 0
    %630 = vmatpush2.bf16.msra.mxu0 %v453
    %631 = vmatprep.subr.bf16.mxu0 0
    %632 = vmatpush2.bf16.msra.mxu0 %v452
    %633 = vmatprep.subr.bf16.mxu0 0
    %634 = vmatpush2.bf16.msra.mxu0 %v451
    %635 = vmatprep.mubr.bf16.mxu0 %v108
    %636 = vmatmul.mubr.bf16.gmra.mxu0 %v107
    %v637 = vpop.f32.mrf.mxu0
    %v638 = vadd.f32 %v590, %v637
    %v639 = vpop.f32.mrf.mxu0
    %v640 = vpop.f32.mrf.mxu0
    %v641 = vadd.f32 %v593, %v640
    %v642 = vpop.f32.mrf.mxu0
    %643 = vmatprep.mubr.bf16.mxu0 %v114
    %644 = vmatmul.mubr.bf16.gmra.mxu0 %v113
    %v645 = vpop.f32.mrf.mxu0
    %v646 = vadd.f32 %v598, %v645
    %v647 = vpop.f32.mrf.mxu0
    %v648 = vpop.f32.mrf.mxu0
    %v649 = vpop.f32.mrf.mxu0
    %650 = vdwg.mxu0
    %v651 = vmax.f32 %v638, 0.0
    %v652 = vmax.f32 %v641, 0.0
    %v653 = vmax.f32 %v646, 0.0
    %v654 = vpack.c.bf16 %v652, %v651
    %v655 = vpack.c.bf16 %v653, %v653
    %v656 = vld [vmem:[%s3] sm:$0xff]
    %v657 = vld [vmem:[%s3 + $0x8] sm:$0xff]
    %v658 = vld [vmem:[%s3 + $0x10] sm:$0xff]
    %v659 = vld [vmem:[%s3 + $0x18] sm:$0xff]
    %v660 = vld [vmem:[%s3 + $0x20] sm:$0xff]
    %v661 = vld [vmem:[%s3 + $0x28] sm:$0xff]
    %v662 = vld [vmem:[%s3 + $0x30] sm:$0xff]
    %v663 = vld [vmem:[%s3 + $0x38] sm:$0xff]
    %v672 = vunpack.c.l.b16 %v656
    %v673 = vunpack.c.h.b16 %v656
    %v674 = vunpack.c.l.b16 %v657
    %v675 = vunpack.c.h.b16 %v657
    %v676 = vunpack.c.l.b16 %v658
    %v677 = vunpack.c.h.b16 %v658
    %v678 = vunpack.c.l.b16 %v659
    %v679 = vunpack.c.h.b16 %v659
    %v680 = vunpack.c.l.b16 %v660
    %v681 = vunpack.c.h.b16 %v660
    %v682 = vunpack.c.l.b16 %v661
    %v683 = vunpack.c.h.b16 %v661
    %v684 = vunpack.c.l.b16 %v662
    %v685 = vunpack.c.h.b16 %v662
    %v686 = vunpack.c.l.b16 %v663
    %v687 = vunpack.c.h.b16 %v663
    %v688 = vpack.c.b16 %v674, %v672
    %v689 = vpack.c.b16 %v675, %v673
    %v690 = vpack.c.b16 %v678, %v676
    %v691 = vpack.c.b16 %v679, %v677
    %v692 = vpack.c.b16 %v682, %v680
    %v693 = vpack.c.b16 %v683, %v681
    %v694 = vpack.c.b16 %v686, %v684
    %v695 = vpack.c.b16 %v687, %v685
    %vm704 = vcmask 523264
    %v706 = vsel %vm704, %v654, 0
    %v709 = vsel %vm704, %v655, 0
    %711 = vmatprep.subr.bf16.mxu0 0
    %712 = vmatpush1.bf16.msra.mxu0 0
    %713 = vmatprep.subr.bf16.mxu0 0
    %714 = vmatpush1.bf16.msra.mxu0 0
    %715 = vmatprep.subr.bf16.mxu0 0
    %716 = vmatpush1.bf16.msra.mxu0 0
    %717 = vmatprep.subr.bf16.mxu0 0
    %718 = vmatpush1.bf16.msra.mxu0 0
    %719 = vmatprep.subr.bf16.mxu0 %v695
    %720 = vmatpush1.bf16.msra.mxu0 %v694
    %721 = vmatprep.subr.bf16.mxu0 %v693
    %722 = vmatpush1.bf16.msra.mxu0 %v692
    %723 = vmatprep.subr.bf16.mxu0 %v691
    %724 = vmatpush1.bf16.msra.mxu0 %v690
    %725 = vmatprep.subr.bf16.mxu0 %v689
    %726 = vmatpush1.bf16.msra.mxu0 %v688
    %727 = vmatprep.subr.bf16.mxu0 0
    %728 = vmatpush2.bf16.msra.mxu0 0
    %729 = vmatprep.subr.bf16.mxu0 0
    %730 = vmatpush2.bf16.msra.mxu0 0
    %731 = vmatprep.subr.bf16.mxu0 0
    %732 = vmatpush2.bf16.msra.mxu0 0
    %733 = vmatprep.subr.bf16.mxu0 0
    %734 = vmatpush2.bf16.msra.mxu0 0
    %735 = vmatprep.subr.bf16.mxu0 0
    %736 = vmatpush2.bf16.msra.mxu0 0
    %737 = vmatprep.subr.bf16.mxu0 0
    %738 = vmatpush2.bf16.msra.mxu0 0
    %739 = vmatprep.subr.bf16.mxu0 0
    %740 = vmatpush2.bf16.msra.mxu0 0
    %741 = vmatprep.subr.bf16.mxu0 0
    %742 = vmatpush2.bf16.msra.mxu0 0
    %743 = vmatprep.mubr.bf16.mxu0 0
    %744 = vmatmul.mubr.bf16.gmra.mxu0 %v706
    %v745 = vpop.f32.mrf.mxu0
    %v746 = vadd.f32 0.0, %v745
    %v747 = vpop.f32.mrf.mxu0
    %v748 = vpop.f32.mrf.mxu0
    %v749 = vadd.f32 0.0, %v748
    %v750 = vpop.f32.mrf.mxu0
    %751 = vmatprep.mubr.bf16.mxu0 0
    %752 = vmatmul.mubr.bf16.gmra.mxu0 %v709
    %v753 = vpop.f32.mrf.mxu0
    %v754 = vpop.f32.mrf.mxu0
    %v755 = vadd.f32 0.0, %v754
    %v756 = vpop.f32.mrf.mxu0
    %v757 = vpop.f32.mrf.mxu0
    %758 = vdwg.mxu0
    %v760 = vlaneseq
    %v761 = vshrl.u32 %v760, 7
    %v762 = vsub.s32 0, %v761
    %v763 = vrot.slane %v116, %v762
    %v765 = vadd.f32 %v755, %v763
    %v768 = vunpack.c.l.s4 1966171168
    %v769 = vunpack.c.0.s8 %v768
    %v770 = vlaneseq
    %v771 = vshrl.u32 %v770, 7
    %v772 = vsub.s32 %v769, %v771
    %v773 = vrot.slane %v765, %v772
    %v774 = vcombine.high %v773, %v773
    %v776 = vunpack.c.l.s4 1966171168
    %v777 = vunpack.c.0.s8 %v776
    %v778 = vlaneseq
    %v779 = vshrl.u32 %v778, 7
    %v780 = vsub.s32 %v777, %v779
    %v781 = vrot.slane %v773, %v780
    %v783 = vunpack.c.l.s4 1966171168
    %v784 = vunpack.c.0.s8 %v783
    %v785 = vlaneseq
    %v786 = vshrl.u32 %v785, 7
    %v787 = vsub.s32 %v784, %v786
    %v788 = vrot.slane %v774, %v787
    %v789 = vlaneseq
    %v790 = vshrl.u32 %v789, 7
    %v791 = vsub.s32 0, %v790
    %v792 = vrot.slane %v781, %v791
    %v793 = vlaneseq
    %v794 = vshrl.u32 %v793, 7
    %v795 = vsub.s32 0, %v794
    %v796 = vrot.slane %v788, %v795
    %v799 = vadd.f32 %v746, %v792
    %v800 = vadd.f32 %v749, %v796
    %vm801 = vcmask 138240
    %802 = vst.msk [vmem:[#allocation2] sm:$0xff] %vm801, %v799
    %803 = vst.msk [vmem:[#allocation2 + $0x8] sm:$0xff] %vm801, %v800
    // Predicated region
    $region22: #{tpu_custom_call.1} parent=1 // pred_check
      _
    $region23: #{tpu_custom_call.1} parent=1 // pred_check_branch
      %805 = sbr.rel (0) target = $region25
    $region24: #{tpu_custom_call.1} parent=1 // pred_region
      %s807 = ssub.s32 256, 256
      %808 = vsyncadd [#allocation3], %s807
      %s809 = sshll.u32 [#allocation2], 4
      %s810 = int_to_ptr.vmem [resolvable:$true] %s809
      %815 = dma.vmem_to_hbm [thread:$0]  %s810, 256, %s5, [#allocation3], 128, 128, 8
    $region25: #{tpu_custom_call.1} parent=1 // pred_fallthru
      _
    // Predicated region
    $region26: #{tpu_custom_call.1} parent=1 // pred_check
      _
    $region27: #{tpu_custom_call.1} parent=1 // pred_check_branch
      %817 = sbr.rel (0) target = $region29
    $region28: #{tpu_custom_call.1} parent=1 // pred_region
      %818 = dma.done [#allocation3], 256
    $region29: #{tpu_custom_call.1} parent=1 // pred_fallthru
      _
    %819 = vsyncpa [#allocation3], 1

</llo_original>
